<compile_context>
chip_gen: v7x
topology: tpu7x:2x2x1
jax: 0.10.0
libtpu: 0.0.40
codegen_flags: <defaults>
</compile_context>

<pallas_src>
import functools

import jax
import jax.numpy as jnp
from jax.experimental import pallas as pl
from jax.experimental.pallas import tpu as pltpu

N_FEATURES = 42
HIDDEN = (32, 16)
N_CLASSES = 8
PACK = 16                       # batch rows folded into one 128-lane output row
COMPUTE_DTYPE = jnp.bfloat16    # MXU input dtype; accumulation is always f32.


def _round_up(x, m):
    return (x + m - 1) // m * m


# --------------------------------------------------------------------------- #
# Kernels
# --------------------------------------------------------------------------- #
def _forward_block(x_ref, w1_ref, b1_ref, w2_ref, b2_ref, w3_ref, b3_ref):
    """fc1+ReLU -> fc2+ReLU -> fc3 -> log_softmax for one (tb, 42) batch tile."""
    # f32 -> bf16 cast happens here (VPU has slack); HBM only ever sees f32 x once.
    x = x_ref[...].astype(COMPUTE_DTYPE)                      # (tb, 42)

    h1 = jnp.dot(x, w1_ref[...], preferred_element_type=jnp.float32) + b1_ref[...]
    h1 = jnp.maximum(h1, 0.0)

    h2 = jnp.dot(h1.astype(COMPUTE_DTYPE), w2_ref[...],
                 preferred_element_type=jnp.float32) + b2_ref[...]
    h2 = jnp.maximum(h2, 0.0)

    logits = jnp.dot(h2.astype(COMPUTE_DTYPE), w3_ref[...],
                     preferred_element_type=jnp.float32) + b3_ref[...]

    # Numerically stable log_softmax over the class axis (dim=1), in f32.
    m = jnp.max(logits, axis=-1, keepdims=True)
    shifted = logits - m
    lse = jnp.log(jnp.sum(jnp.exp(shifted), axis=-1, keepdims=True))
    return shifted - lse                                      # (tb, 8) f32


def mlp_kernel_lane_dense(x_ref, w1_ref, b1_ref, w2_ref, b2_ref, w3_ref, b3_ref,
                          o_ref):
    res = _forward_block(x_ref, w1_ref, b1_ref, w2_ref, b2_ref, w3_ref, b3_ref)
    tb = res.shape[0]
    # Row-major repack (tb, 8) -> (tb//16, 128): identical data, lane-dense store.
    o_ref[...] = res.reshape(tb // PACK, PACK * N_CLASSES)


def mlp_kernel_narrow(x_ref, w1_ref, b1_ref, w2_ref, b2_ref, w3_ref, b3_ref,
                      o_ref):
    o_ref[...] = _forward_block(x_ref, w1_ref, b1_ref, w2_ref, b2_ref, w3_ref,
                                b3_ref)


# --------------------------------------------------------------------------- #
# Wrapper
# --------------------------------------------------------------------------- #
def _pick_tile(batch_padded, block_batch):
    """batch_padded is a multiple of 16. Returns the batch tile size."""
    if batch_padded <= 256:
        return batch_padded                        # single block, tiny batch
    # 128-row granularity keeps the lane-dense out block 8-sublane aligned, and
    # clamping to ceil(B/2) guarantees >= 2 grid steps (both v7x TensorCores).
    tb = min(block_batch,
             _round_up(pl.cdiv(batch_padded, 2), 128),
             _round_up(batch_padded, 128))
    return max(128, tb)


def _compiler_params(tb):
    kwargs = dict(dimension_semantics=("parallel",))   # megacore sharding on v7x
    if tb > 512:
        # Large tiles: ~3-4 KiB of lane-padded f32 live values per batch row
        # (x double-buffer + spilled intermediates) -> ~30 MiB at tb=8192,
        # which needs more than the v5e/v6e/v7x scoped defaults but stays well
        # inside v7x's 64 MiB physical VMEM.
        kwargs["vmem_limit_bytes"] = 60 * 1024 * 1024
    return pltpu.CompilerParams(**kwargs)


def _resident(shape):
    # Constant index_map: fetched once, stays resident in VMEM across the grid.
    return pl.BlockSpec(shape, lambda i: (0, 0))


@functools.partial(jax.jit, static_argnames=("block_batch", "lane_dense"))
def _mlp_forward_jit(x, packed_params, block_batch, lane_dense):
    w1, b1, w2, b2, w3, b3 = packed_params
    B = x.shape[0]
    Bp = _round_up(B, PACK)
    if Bp != B:
        # Keep every block in-bounds and the repack factor exact. Real
        # workloads should feed B % 16 == 0 to avoid this extra copy of x.
        x = jnp.pad(x, ((0, Bp - B), (0, 0)))

    tb = _pick_tile(Bp, block_batch)
    grid = (pl.cdiv(Bp, tb),)
    in_specs = [pl.BlockSpec((tb, N_FEATURES), lambda i: (i, 0))] + [
        _resident(a.shape) for a in (w1, b1, w2, b2, w3, b3)
    ]
    args = (x, w1, b1, w2, b2, w3, b3)

    if lane_dense:
        rows = Bp // PACK
        out = pl.pallas_call(
            mlp_kernel_lane_dense,
            out_shape=jax.ShapeDtypeStruct((rows, PACK * N_CLASSES), jnp.float32),
            grid=grid,
            in_specs=in_specs,
            out_specs=pl.BlockSpec((tb // PACK, PACK * N_CLASSES),
                                   lambda i: (i, 0)),
            compiler_params=_compiler_params(tb),
        )(*args)
        out = out.reshape(Bp, N_CLASSES)           # free row-major reshape
    else:
        out = pl.pallas_call(
            mlp_kernel_narrow,
            out_shape=jax.ShapeDtypeStruct((Bp, N_CLASSES), jnp.float32),
            grid=grid,
            in_specs=in_specs,
            out_specs=pl.BlockSpec((tb, N_CLASSES), lambda i: (i, 0)),
            compiler_params=_compiler_params(tb),
        )(*args)

    return out[:B] if Bp != B else out


_LANE_DENSE_OK = None


def _lane_dense_supported(packed_params):
    """One-time probe: does Mosaic lower the (tb,8)->(tb//16,128) repack and
    produce correct values?  Otherwise fall back to the proven narrow store."""
    global _LANE_DENSE_OK
    if _LANE_DENSE_OK is None:
        try:
            xp = jax.random.normal(jax.random.PRNGKey(1234),
                                   (256, N_FEATURES), jnp.float32)
            got = jax.block_until_ready(
                _mlp_forward_jit(xp, packed_params, block_batch=256,
                                 lane_dense=True))
            want = reference_forward(xp, packed_params,
                                     compute_dtype=COMPUTE_DTYPE)
            _LANE_DENSE_OK = bool(jnp.allclose(got, want, atol=5e-3, rtol=5e-3))
        except Exception:
            _LANE_DENSE_OK = False
    return _LANE_DENSE_OK


def mlp_forward(x, packed_params, *, block_batch=8192, lane_dense=None):
    """MLP forward. x: (B, 42) float32; returns (B, 8) f32 log-probabilities.

    `packed_params` must come from prepare_params(). `block_batch` caps the
    batch tile (default 8192 is sized for v7x's 64 MiB VMEM; v5e/v6e can go
    higher). `lane_dense=None` auto-detects the lane-dense output path.
    """
    if lane_dense is None:
        lane_dense = _lane_dense_supported(packed_params)
    return _mlp_forward_jit(x, packed_params, block_batch=block_batch,
                            lane_dense=bool(lane_dense))


# --------------------------------------------------------------------------- #
# Parameters & reference
# --------------------------------------------------------------------------- #
def init_params(key):
    """Deterministic synthetic parameters. Weights are stored transposed vs
    PyTorch nn.Linear, i.e. (in_features, out_features), so the kernel computes
    y = x @ W + b directly on the MXU."""
    ks = jax.random.split(key, 6)
    w1 = jax.random.normal(ks[0], (N_FEATURES, HIDDEN[0]), jnp.float32) * 0.1
    b1 = jax.random.normal(ks[1], (1, HIDDEN[0]), jnp.float32) * 0.1
    w2 = jax.random.normal(ks[2], (HIDDEN[0], HIDDEN[1]), jnp.float32) * 0.1
    b2 = jax.random.normal(ks[3], (1, HIDDEN[1]), jnp.float32) * 0.1
    w3 = jax.random.normal(ks[4], (HIDDEN[1], N_CLASSES), jnp.float32) * 0.1
    b3 = jax.random.normal(ks[5], (1, N_CLASSES), jnp.float32) * 0.1
    return w1, b1, w2, b2, w3, b3


def prepare_params(params):
    """One-time packing (outside the per-call jit): bf16 weights for the MXU,
    f32 (1, n) biases -- avoids six per-invocation cast kernels."""
    w1, b1, w2, b2, w3, b3 = params
    return (jnp.asarray(w1, COMPUTE_DTYPE), jnp.asarray(b1, jnp.float32).reshape(1, -1),
            jnp.asarray(w2, COMPUTE_DTYPE), jnp.asarray(b2, jnp.float32).reshape(1, -1),
            jnp.asarray(w3, COMPUTE_DTYPE), jnp.asarray(b3, jnp.float32).reshape(1, -1))


def reference_forward(x, params, compute_dtype=None):
    """Pure-JAX reference. With compute_dtype=bf16 it mirrors the kernel's
    mixed-precision path; with None it is the exact f32 PyTorch semantics."""
    w1, b1, w2, b2, w3, b3 = params
    if compute_dtype is not None:
        x = x.astype(compute_dtype)
        w1, w2, w3 = (w.astype(compute_dtype) for w in (w1, w2, w3))
    h1 = jnp.maximum(jnp.dot(x, w1, preferred_element_type=jnp.float32) + b1, 0.0)
    h2 = jnp.maximum(
        jnp.dot(h1.astype(x.dtype), w2, preferred_element_type=jnp.float32) + b2, 0.0)
    logits = jnp.dot(h2.astype(x.dtype), w3,
                     preferred_element_type=jnp.float32) + b3
    return jax.nn.log_softmax(logits, axis=1)


# --------------------------------------------------------------------------- #
# Self-test
# --------------------------------------------------------------------------- #
if __name__ == "__main__":
    key = jax.random.PRNGKey(0)
    k_x, k_p = jax.random.split(key)
    params = init_params(k_p)
    packed = prepare_params(params)

    # Small exact-tile case (single block).
    batch = 16
    x = jax.random.normal(k_x, (batch, N_FEATURES), jnp.float32)
    out = jax.block_until_ready(mlp_forward(x, packed))
    assert out.shape == (batch, N_CLASSES)
    assert out.dtype == jnp.float32

    ref_bf16 = reference_forward(x, params, compute_dtype=COMPUTE_DTYPE)
    assert jnp.allclose(out, ref_bf16, atol=2e-3, rtol=2e-3), "mismatch vs bf16 reference"
    ref_f32 = reference_forward(x, params)
    assert jnp.allclose(out, ref_f32, atol=5e-2, rtol=5e-2), "mismatch vs f32 reference"

    # Ragged batch, multi-step grid (exercises partial blocks + padding path).
    batch2 = 300
    x2 = jax.random.normal(k_x, (batch2, N_FEATURES), jnp.float32)
    out2 = jax.block_until_ready(mlp_forward(x2, packed, block_batch=128))
    ref2 = reference_forward(x2, params, compute_dtype=COMPUTE_DTYPE)
    assert out2.shape == (batch2, N_CLASSES)
    assert jnp.allclose(out2, ref2, atol=2e-3, rtol=2e-3), "mismatch on ragged batch"
    assert bool(jnp.isfinite(out2).all()), "NaN/Inf leaked from padded tail rows"

    # The narrow-store fallback path must stay correct too.
    out3 = jax.block_until_ready(
        mlp_forward(x2, packed, block_batch=128, lane_dense=False))
    assert jnp.allclose(out3, ref2, atol=2e-3, rtol=2e-3), "mismatch on fallback path"

    print("KERNEL_OK")
</pallas_src>

<mosaic_0001>
module attributes {stable_mosaic.version = 11 : i64} {
  func.func @mlp_kernel_lane_dense(%arg0: i32, %arg1: memref<256x42xf32, #tpu.memory_space<vmem>>, %arg2: memref<42x32xbf16, #tpu.memory_space<vmem>>, %arg3: memref<1x32xf32, #tpu.memory_space<vmem>>, %arg4: memref<32x16xbf16, #tpu.memory_space<vmem>>, %arg5: memref<1x16xf32, #tpu.memory_space<vmem>>, %arg6: memref<16x8xbf16, #tpu.memory_space<vmem>>, %arg7: memref<1x8xf32, #tpu.memory_space<vmem>>, %arg8: memref<16x128xf32, #tpu.memory_space<vmem>>) attributes {dimension_semantics = [#tpu.dimension_semantics<parallel>], iteration_bounds = array<i64: 1>, scalar_prefetch = 0 : i64, scratch_operands = 0 : i64, tpu.core_type = #tpu.core_type<tc>, window_params = [{transform_indices = @transform_0, window_bounds = array<i64: 256, 42>}, {pipeline_mode = #tpu.pipeline_mode<synchronous>, transform_indices = @transform_1, window_bounds = array<i64: 42, 32>}, {pipeline_mode = #tpu.pipeline_mode<synchronous>, transform_indices = @transform_2, window_bounds = array<i64: 1, 32>}, {pipeline_mode = #tpu.pipeline_mode<synchronous>, transform_indices = @transform_3, window_bounds = array<i64: 32, 16>}, {pipeline_mode = #tpu.pipeline_mode<synchronous>, transform_indices = @transform_4, window_bounds = array<i64: 1, 16>}, {pipeline_mode = #tpu.pipeline_mode<synchronous>, transform_indices = @transform_5, window_bounds = array<i64: 16, 8>}, {pipeline_mode = #tpu.pipeline_mode<synchronous>, transform_indices = @transform_6, window_bounds = array<i64: 1, 8>}, {transform_indices = @transform_7, window_bounds = array<i64: 16, 128>}]} {
    %c0 = arith.constant 0 : index
    %c0_0 = arith.constant 0 : index
    %0 = vector.load %arg1[%c0, %c0_0] : memref<256x42xf32, #tpu.memory_space<vmem>>, vector<256x42xf32>
    %1 = arith.truncf %0 : vector<256x42xf32> to vector<256x42xbf16>
    %c0_1 = arith.constant 0 : index
    %c0_2 = arith.constant 0 : index
    %2 = vector.load %arg2[%c0_1, %c0_2] : memref<42x32xbf16, #tpu.memory_space<vmem>>, vector<42x32xbf16>
    %cst = arith.constant dense<0.000000e+00> : vector<256x32xf32>
    %3 = tpu.matmul %1, %2, %cst {dimension_numbers = #tpu.dot_dimension_numbers<[1], [0], [0], [1], [0, 0, 1, 1], [], []>} : vector<256x42xbf16>, vector<42x32xbf16>, vector<256x32xf32> -> vector<256x32xf32>
    %c0_3 = arith.constant 0 : index
    %c0_4 = arith.constant 0 : index
    %4 = vector.load %arg3[%c0_3, %c0_4] : memref<1x32xf32, #tpu.memory_space<vmem>>, vector<1x32xf32>
    %5 = vector.broadcast %4 : vector<1x32xf32> to vector<256x32xf32>
    %6 = arith.addf %3, %5 : vector<256x32xf32>
    %cst_5 = arith.constant 0.000000e+00 : f32
    %7 = vector.broadcast %cst_5 : f32 to vector<256x32xf32>
    %8 = arith.maximumf %6, %7 : vector<256x32xf32>
    %9 = arith.truncf %8 : vector<256x32xf32> to vector<256x32xbf16>
    %c0_6 = arith.constant 0 : index
    %c0_7 = arith.constant 0 : index
    %10 = vector.load %arg4[%c0_6, %c0_7] : memref<32x16xbf16, #tpu.memory_space<vmem>>, vector<32x16xbf16>
    %cst_8 = arith.constant dense<0.000000e+00> : vector<256x16xf32>
    %11 = tpu.matmul %9, %10, %cst_8 {dimension_numbers = #tpu.dot_dimension_numbers<[1], [0], [0], [1], [0, 0, 1, 1], [], []>} : vector<256x32xbf16>, vector<32x16xbf16>, vector<256x16xf32> -> vector<256x16xf32>
    %c0_9 = arith.constant 0 : index
    %c0_10 = arith.constant 0 : index
    %12 = vector.load %arg5[%c0_9, %c0_10] : memref<1x16xf32, #tpu.memory_space<vmem>>, vector<1x16xf32>
    %13 = vector.broadcast %12 : vector<1x16xf32> to vector<256x16xf32>
    %14 = arith.addf %11, %13 : vector<256x16xf32>
    %cst_11 = arith.constant 0.000000e+00 : f32
    %15 = vector.broadcast %cst_11 : f32 to vector<256x16xf32>
    %16 = arith.maximumf %14, %15 : vector<256x16xf32>
    %17 = arith.truncf %16 : vector<256x16xf32> to vector<256x16xbf16>
    %c0_12 = arith.constant 0 : index
    %c0_13 = arith.constant 0 : index
    %18 = vector.load %arg6[%c0_12, %c0_13] : memref<16x8xbf16, #tpu.memory_space<vmem>>, vector<16x8xbf16>
    %cst_14 = arith.constant dense<0.000000e+00> : vector<256x8xf32>
    %19 = tpu.matmul %17, %18, %cst_14 {dimension_numbers = #tpu.dot_dimension_numbers<[1], [0], [0], [1], [0, 0, 1, 1], [], []>} : vector<256x16xbf16>, vector<16x8xbf16>, vector<256x8xf32> -> vector<256x8xf32>
    %c0_15 = arith.constant 0 : index
    %c0_16 = arith.constant 0 : index
    %20 = vector.load %arg7[%c0_15, %c0_16] : memref<1x8xf32, #tpu.memory_space<vmem>>, vector<1x8xf32>
    %21 = vector.broadcast %20 : vector<1x8xf32> to vector<256x8xf32>
    %22 = arith.addf %19, %21 : vector<256x8xf32>
    %cst_17 = arith.constant dense<0xFF800000> : vector<256xf32>
    %23 = vector.multi_reduction <maximumf>, %22, %cst_17 [1] : vector<256x8xf32> to vector<256xf32>
    %24 = vector.shape_cast %23 : vector<256xf32> to vector<256x1xf32>
    %25 = vector.broadcast %24 : vector<256x1xf32> to vector<256x8xf32>
    %26 = arith.subf %22, %25 : vector<256x8xf32>
    %27 = math.exp %26 : vector<256x8xf32>
    %cst_18 = arith.constant dense<0.000000e+00> : vector<256xf32>
    %28 = vector.multi_reduction <add>, %27, %cst_18 [1] : vector<256x8xf32> to vector<256xf32>
    %29 = vector.shape_cast %28 : vector<256xf32> to vector<256x1xf32>
    %30 = math.log %29 : vector<256x1xf32>
    %31 = vector.broadcast %30 : vector<256x1xf32> to vector<256x8xf32>
    %32 = arith.subf %26, %31 : vector<256x8xf32>
    %33 = vector.shape_cast %32 : vector<256x8xf32> to vector<16x128xf32>
    %c0_19 = arith.constant 0 : index
    %c0_20 = arith.constant 0 : index
    %34 = vector.load %arg8[%c0_19, %c0_20] : memref<16x128xf32, #tpu.memory_space<vmem>>, vector<16x128xf32>
    tpu.vector_store %arg8[%c0_19, %c0_20], %33 {strides = array<i32>} : memref<16x128xf32, #tpu.memory_space<vmem>>, vector<16x128xf32>,
    return
  }
  func.func @transform_0(%arg0: i32) -> (i32, i32) {
    %c0_i32 = arith.constant 0 : i32
    %c0_i32_0 = arith.constant 0 : i32
    return %arg0, %c0_i32 : i32, i32
  }
  func.func @transform_1(%arg0: i32) -> (i32, i32) {
    %c0_i32 = arith.constant 0 : i32
    %c0_i32_0 = arith.constant 0 : i32
    %c0_i32_1 = arith.constant 0 : i32
    return %c0_i32, %c0_i32_0 : i32, i32
  }
  func.func @transform_2(%arg0: i32) -> (i32, i32) {
    %c0_i32 = arith.constant 0 : i32
    %c0_i32_0 = arith.constant 0 : i32
    %c0_i32_1 = arith.constant 0 : i32
    return %c0_i32, %c0_i32_0 : i32, i32
  }
  func.func @transform_3(%arg0: i32) -> (i32, i32) {
    %c0_i32 = arith.constant 0 : i32
    %c0_i32_0 = arith.constant 0 : i32
    %c0_i32_1 = arith.constant 0 : i32
    return %c0_i32, %c0_i32_0 : i32, i32
  }
  func.func @transform_4(%arg0: i32) -> (i32, i32) {
    %c0_i32 = arith.constant 0 : i32
    %c0_i32_0 = arith.constant 0 : i32
    %c0_i32_1 = arith.constant 0 : i32
    return %c0_i32, %c0_i32_0 : i32, i32
  }
  func.func @transform_5(%arg0: i32) -> (i32, i32) {
    %c0_i32 = arith.constant 0 : i32
    %c0_i32_0 = arith.constant 0 : i32
    %c0_i32_1 = arith.constant 0 : i32
    return %c0_i32, %c0_i32_0 : i32, i32
  }
  func.func @transform_6(%arg0: i32) -> (i32, i32) {
    %c0_i32 = arith.constant 0 : i32
    %c0_i32_0 = arith.constant 0 : i32
    %c0_i32_1 = arith.constant 0 : i32
    return %c0_i32, %c0_i32_0 : i32, i32
  }
  func.func @transform_7(%arg0: i32) -> (i32, i32) {
    %c0_i32 = arith.constant 0 : i32
    %c0_i32_0 = arith.constant 0 : i32
    return %arg0, %c0_i32 : i32, i32
  }
}

module attributes {stable_mosaic.version = 11 : i64} {
  func.func @mlp_kernel_narrow(%arg0: i32, %arg1: memref<16x42xf32, #tpu.memory_space<vmem>>, %arg2: memref<42x32xbf16, #tpu.memory_space<vmem>>, %arg3: memref<1x32xf32, #tpu.memory_space<vmem>>, %arg4: memref<32x16xbf16, #tpu.memory_space<vmem>>, %arg5: memref<1x16xf32, #tpu.memory_space<vmem>>, %arg6: memref<16x8xbf16, #tpu.memory_space<vmem>>, %arg7: memref<1x8xf32, #tpu.memory_space<vmem>>, %arg8: memref<16x8xf32, #tpu.memory_space<vmem>>) attributes {dimension_semantics = [#tpu.dimension_semantics<parallel>], iteration_bounds = array<i64: 1>, scalar_prefetch = 0 : i64, scratch_operands = 0 : i64, tpu.core_type = #tpu.core_type<tc>, window_params = [{transform_indices = @transform_0, window_bounds = array<i64: 16, 42>}, {pipeline_mode = #tpu.pipeline_mode<synchronous>, transform_indices = @transform_1, window_bounds = array<i64: 42, 32>}, {pipeline_mode = #tpu.pipeline_mode<synchronous>, transform_indices = @transform_2, window_bounds = array<i64: 1, 32>}, {pipeline_mode = #tpu.pipeline_mode<synchronous>, transform_indices = @transform_3, window_bounds = array<i64: 32, 16>}, {pipeline_mode = #tpu.pipeline_mode<synchronous>, transform_indices = @transform_4, window_bounds = array<i64: 1, 16>}, {pipeline_mode = #tpu.pipeline_mode<synchronous>, transform_indices = @transform_5, window_bounds = array<i64: 16, 8>}, {pipeline_mode = #tpu.pipeline_mode<synchronous>, transform_indices = @transform_6, window_bounds = array<i64: 1, 8>}, {transform_indices = @transform_7, window_bounds = array<i64: 16, 8>}]} {
    %c0 = arith.constant 0 : index
    %c0_0 = arith.constant 0 : index
    %0 = vector.load %arg1[%c0, %c0_0] : memref<16x42xf32, #tpu.memory_space<vmem>>, vector<16x42xf32>
    %1 = arith.truncf %0 : vector<16x42xf32> to vector<16x42xbf16>
    %c0_1 = arith.constant 0 : index
    %c0_2 = arith.constant 0 : index
    %2 = vector.load %arg2[%c0_1, %c0_2] : memref<42x32xbf16, #tpu.memory_space<vmem>>, vector<42x32xbf16>
    %cst = arith.constant dense<0.000000e+00> : vector<16x32xf32>
    %3 = tpu.matmul %1, %2, %cst {dimension_numbers = #tpu.dot_dimension_numbers<[1], [0], [0], [1], [0, 0, 1, 1], [], []>} : vector<16x42xbf16>, vector<42x32xbf16>, vector<16x32xf32> -> vector<16x32xf32>
    %c0_3 = arith.constant 0 : index
    %c0_4 = arith.constant 0 : index
    %4 = vector.load %arg3[%c0_3, %c0_4] : memref<1x32xf32, #tpu.memory_space<vmem>>, vector<1x32xf32>
    %5 = vector.broadcast %4 : vector<1x32xf32> to vector<16x32xf32>
    %6 = arith.addf %3, %5 : vector<16x32xf32>
    %cst_5 = arith.constant 0.000000e+00 : f32
    %7 = vector.broadcast %cst_5 : f32 to vector<16x32xf32>
    %8 = arith.maximumf %6, %7 : vector<16x32xf32>
    %9 = arith.truncf %8 : vector<16x32xf32> to vector<16x32xbf16>
    %c0_6 = arith.constant 0 : index
    %c0_7 = arith.constant 0 : index
    %10 = vector.load %arg4[%c0_6, %c0_7] : memref<32x16xbf16, #tpu.memory_space<vmem>>, vector<32x16xbf16>
    %cst_8 = arith.constant dense<0.000000e+00> : vector<16x16xf32>
    %11 = tpu.matmul %9, %10, %cst_8 {dimension_numbers = #tpu.dot_dimension_numbers<[1], [0], [0], [1], [0, 0, 1, 1], [], []>} : vector<16x32xbf16>, vector<32x16xbf16>, vector<16x16xf32> -> vector<16x16xf32>
    %c0_9 = arith.constant 0 : index
    %c0_10 = arith.constant 0 : index
    %12 = vector.load %arg5[%c0_9, %c0_10] : memref<1x16xf32, #tpu.memory_space<vmem>>, vector<1x16xf32>
    %13 = vector.broadcast %12 : vector<1x16xf32> to vector<16x16xf32>
    %14 = arith.addf %11, %13 : vector<16x16xf32>
    %cst_11 = arith.constant 0.000000e+00 : f32
    %15 = vector.broadcast %cst_11 : f32 to vector<16x16xf32>
    %16 = arith.maximumf %14, %15 : vector<16x16xf32>
    %17 = arith.truncf %16 : vector<16x16xf32> to vector<16x16xbf16>
    %c0_12 = arith.constant 0 : index
    %c0_13 = arith.constant 0 : index
    %18 = vector.load %arg6[%c0_12, %c0_13] : memref<16x8xbf16, #tpu.memory_space<vmem>>, vector<16x8xbf16>
    %cst_14 = arith.constant dense<0.000000e+00> : vector<16x8xf32>
    %19 = tpu.matmul %17, %18, %cst_14 {dimension_numbers = #tpu.dot_dimension_numbers<[1], [0], [0], [1], [0, 0, 1, 1], [], []>} : vector<16x16xbf16>, vector<16x8xbf16>, vector<16x8xf32> -> vector<16x8xf32>
    %c0_15 = arith.constant 0 : index
    %c0_16 = arith.constant 0 : index
    %20 = vector.load %arg7[%c0_15, %c0_16] : memref<1x8xf32, #tpu.memory_space<vmem>>, vector<1x8xf32>
    %21 = vector.broadcast %20 : vector<1x8xf32> to vector<16x8xf32>
    %22 = arith.addf %19, %21 : vector<16x8xf32>
    %cst_17 = arith.constant dense<0xFF800000> : vector<16xf32>
    %23 = vector.multi_reduction <maximumf>, %22, %cst_17 [1] : vector<16x8xf32> to vector<16xf32>
    %24 = vector.shape_cast %23 : vector<16xf32> to vector<16x1xf32>
    %25 = vector.broadcast %24 : vector<16x1xf32> to vector<16x8xf32>
    %26 = arith.subf %22, %25 : vector<16x8xf32>
    %27 = math.exp %26 : vector<16x8xf32>
    %cst_18 = arith.constant dense<0.000000e+00> : vector<16xf32>
    %28 = vector.multi_reduction <add>, %27, %cst_18 [1] : vector<16x8xf32> to vector<16xf32>
    %29 = vector.shape_cast %28 : vector<16xf32> to vector<16x1xf32>
    %30 = math.log %29 : vector<16x1xf32>
    %31 = vector.broadcast %30 : vector<16x1xf32> to vector<16x8xf32>
    %32 = arith.subf %26, %31 : vector<16x8xf32>
    %c0_19 = arith.constant 0 : index
    %c0_20 = arith.constant 0 : index
    %33 = vector.load %arg8[%c0_19, %c0_20] : memref<16x8xf32, #tpu.memory_space<vmem>>, vector<16x8xf32>
    tpu.vector_store %arg8[%c0_19, %c0_20], %32 {strides = array<i32>} : memref<16x8xf32, #tpu.memory_space<vmem>>, vector<16x8xf32>,
    return
  }
  func.func @transform_0(%arg0: i32) -> (i32, i32) {
    %c0_i32 = arith.constant 0 : i32
    %c0_i32_0 = arith.constant 0 : i32
    return %arg0, %c0_i32 : i32, i32
  }
  func.func @transform_1(%arg0: i32) -> (i32, i32) {
    %c0_i32 = arith.constant 0 : i32
    %c0_i32_0 = arith.constant 0 : i32
    %c0_i32_1 = arith.constant 0 : i32
    return %c0_i32, %c0_i32_0 : i32, i32
  }
  func.func @transform_2(%arg0: i32) -> (i32, i32) {
    %c0_i32 = arith.constant 0 : i32
    %c0_i32_0 = arith.constant 0 : i32
    %c0_i32_1 = arith.constant 0 : i32
    return %c0_i32, %c0_i32_0 : i32, i32
  }
  func.func @transform_3(%arg0: i32) -> (i32, i32) {
    %c0_i32 = arith.constant 0 : i32
    %c0_i32_0 = arith.constant 0 : i32
    %c0_i32_1 = arith.constant 0 : i32
    return %c0_i32, %c0_i32_0 : i32, i32
  }
  func.func @transform_4(%arg0: i32) -> (i32, i32) {
    %c0_i32 = arith.constant 0 : i32
    %c0_i32_0 = arith.constant 0 : i32
    %c0_i32_1 = arith.constant 0 : i32
    return %c0_i32, %c0_i32_0 : i32, i32
  }
  func.func @transform_5(%arg0: i32) -> (i32, i32) {
    %c0_i32 = arith.constant 0 : i32
    %c0_i32_0 = arith.constant 0 : i32
    %c0_i32_1 = arith.constant 0 : i32
    return %c0_i32, %c0_i32_0 : i32, i32
  }
  func.func @transform_6(%arg0: i32) -> (i32, i32) {
    %c0_i32 = arith.constant 0 : i32
    %c0_i32_0 = arith.constant 0 : i32
    %c0_i32_1 = arith.constant 0 : i32
    return %c0_i32, %c0_i32_0 : i32, i32
  }
  func.func @transform_7(%arg0: i32) -> (i32, i32) {
    %c0_i32 = arith.constant 0 : i32
    %c0_i32_0 = arith.constant 0 : i32
    return %arg0, %c0_i32 : i32, i32
  }
}

</mosaic_0001>

<llo_original>
// kernel: _mlp_forward_jit.1
$region0: #{_mlp_forward_jit.1}
  #allocation0 [shape = 'u32[]', space=smem, size = 0x4, offset = 0x4, fixed_abs, tag = 'smem constant byte address 0x4 - core index']
  #allocation1 [shape = 'u32[144,128]{1,0:T(1,128)}', space=vmem, size = 0x12000, scoped, tag = 'internal scratch']
  %s0 = inlined_call_operand.vmem [shape: f32[16,42], index: 0, kind: input, shape index: {}]
  %s1 = inlined_call_operand.vmem [shape: bf16[42,32], index: 1, kind: input, shape index: {}]
  %s2 = inlined_call_operand.vmem [shape: f32[1,32], index: 2, kind: input, shape index: {}]
  %s3 = inlined_call_operand.vmem [shape: bf16[32,16], index: 3, kind: input, shape index: {}]
  %s4 = inlined_call_operand.vmem [shape: f32[1,16], index: 4, kind: input, shape index: {}]
  %s5 = inlined_call_operand.vmem [shape: bf16[16,8], index: 5, kind: input, shape index: {}]
  %s6 = inlined_call_operand.vmem [shape: f32[1,8], index: 6, kind: input, shape index: {}]
  %s7 = inlined_call_operand.vmem [shape: f32[16,8], index: 7, kind: output, shape index: {}]
  %s8 = sld [smem:[#allocation0]]
  $region38: #{_mlp_forward_jit.1} parent=0
    _
  %s10 = ssub.s32 1, %s8
  %s11 = scalar_select 0, %s10, %s8
  // Predicated region
  $region2: #{_mlp_forward_jit.1} parent=0 // pred_check
    _
  $region3: #{_mlp_forward_jit.1} parent=0 // pred_check_branch
    %13 = sbr.rel (0) target = $region5
  $region4: #{_mlp_forward_jit.1} parent=0 // pred_region
    _
  $region5: #{_mlp_forward_jit.1} parent=0 // pred_fallthru
    _
  // Predicated region
  $region6: #{_mlp_forward_jit.1} parent=0 // pred_check
    _
  $region7: #{_mlp_forward_jit.1} parent=0 // pred_check_branch
    %15 = sbr.rel (0) target = $region9
  $region8: #{_mlp_forward_jit.1} parent=0 // pred_region
    _
  $region9: #{_mlp_forward_jit.1} parent=0 // pred_fallthru
    _
  // Predicated region
  $region10: #{_mlp_forward_jit.1} parent=0 // pred_check
    _
  $region11: #{_mlp_forward_jit.1} parent=0 // pred_check_branch
    %17 = sbr.rel (0) target = $region13
  $region12: #{_mlp_forward_jit.1} parent=0 // pred_region
    _
  $region13: #{_mlp_forward_jit.1} parent=0 // pred_fallthru
    _
  // Predicated region
  $region14: #{_mlp_forward_jit.1} parent=0 // pred_check
    _
  $region15: #{_mlp_forward_jit.1} parent=0 // pred_check_branch
    %19 = sbr.rel (0) target = $region17
  $region16: #{_mlp_forward_jit.1} parent=0 // pred_region
    _
  $region17: #{_mlp_forward_jit.1} parent=0 // pred_fallthru
    _
  // Predicated region
  $region18: #{_mlp_forward_jit.1} parent=0 // pred_check
    _
  $region19: #{_mlp_forward_jit.1} parent=0 // pred_check_branch
    %21 = sbr.rel (0) target = $region21
  $region20: #{_mlp_forward_jit.1} parent=0 // pred_region
    _
  $region21: #{_mlp_forward_jit.1} parent=0 // pred_fallthru
    _
  // Predicated region
  $region22: #{_mlp_forward_jit.1} parent=0 // pred_check
    _
  $region23: #{_mlp_forward_jit.1} parent=0 // pred_check_branch
    %23 = sbr.rel (0) target = $region25
  $region24: #{_mlp_forward_jit.1} parent=0 // pred_region
    _
  $region25: #{_mlp_forward_jit.1} parent=0 // pred_fallthru
    _
  // Predicated region
  $region26: #{_mlp_forward_jit.1} parent=0 // pred_check
    _
  $region27: #{_mlp_forward_jit.1} parent=0 // pred_check_branch
    %25 = sbr.rel (0) target = $region29
  $region28: #{_mlp_forward_jit.1} parent=0 // pred_region
    _
  $region29: #{_mlp_forward_jit.1} parent=0 // pred_fallthru
    _
  %v27 = vld [vmem:[%s0] sm:$0xff]
  %v28 = vld [vmem:[%s0 + $0x8] sm:$0xff]
  %v29 = vpack.c.bf16 %v28, %v27
  %v30 = vld [vmem:[%s1] sm:$0xf]
  %v31 = vld [vmem:[%s1 + $0x4] sm:$0xf]
  %v32 = vld [vmem:[%s1 + $0x8] sm:$0xf]
  %v33 = vld [vmem:[%s1 + $0xc] sm:$0xf]
  %v34 = vld [vmem:[%s1 + $0x10] sm:$0xf]
  %v35 = vld [vmem:[%s1 + $0x14] sm:$0x1]
  %v36 = vld [vmem:[%s2] sm:$0x1]
  %v38 = vlaneseq
  %v39 = vshrl.u32 %v38, 7
  %v40 = vsub.s32 0, %v39
  %v41 = vrot.slane %v36, %v40
  %v49 = vunpack.c.l.b16 %v30
  %v50 = vunpack.c.l.b16 %v31
  %v51 = vunpack.c.l.b16 %v32
  %v52 = vunpack.c.l.b16 %v33
  %v53 = vunpack.c.l.b16 %v34
  %v54 = vunpack.c.l.b16 %v35
  %v55 = vpack.c.b16 %v50, %v49
  %v56 = vpack.c.b16 %v52, %v51
  %v57 = vpack.c.b16 %v54, %v53
  %vm60 = vcmask 343040
  %v62 = vsel %vm60, %v29, 0
  %vm64 = vcmask 1044480
  %v66 = vsel %vm64, %v57, 0
  %68 = vmatprep.subr.bf16.mxu0 0
  %69 = vmatpush1.bf16.msra.mxu0 %v55
  %70 = vmatprep.subr.bf16.mxu0 0
  %71 = vmatpush1.bf16.msra.mxu0 %v56
  %72 = vmatprep.subr.bf16.mxu0 0
  %73 = vmatpush1.bf16.msra.mxu0 %v66
  %74 = vmatprep.subr.bf16.mxu0 0
  %75 = vmatpush1.bf16.msra.mxu0 0
  %76 = vmatprep.subr.bf16.mxu0 0
  %77 = vmatpush1.bf16.msra.mxu0 0
  %78 = vmatprep.subr.bf16.mxu0 0
  %79 = vmatpush1.bf16.msra.mxu0 0
  %80 = vmatprep.subr.bf16.mxu0 0
  %81 = vmatpush1.bf16.msra.mxu0 0
  %82 = vmatprep.subr.bf16.mxu0 0
  %83 = vmatpush1.bf16.msra.mxu0 0
  %84 = vmatprep.subr.bf16.mxu0 0
  %85 = vmatpush1.bf16.msra.mxu0 0
  %86 = vmatprep.subr.bf16.mxu0 0
  %87 = vmatpush1.bf16.msra.mxu0 0
  %88 = vmatprep.subr.bf16.mxu0 0
  %89 = vmatpush1.bf16.msra.mxu0 0
  %90 = vmatprep.subr.bf16.mxu0 0
  %91 = vmatpush1.bf16.msra.mxu0 0
  %92 = vmatprep.subr.bf16.mxu0 0
  %93 = vmatpush1.bf16.msra.mxu0 0
  %94 = vmatprep.subr.bf16.mxu0 0
  %95 = vmatpush1.bf16.msra.mxu0 0
  %96 = vmatprep.subr.bf16.mxu0 0
  %97 = vmatpush1.bf16.msra.mxu0 0
  %98 = vmatprep.subr.bf16.mxu0 0
  %99 = vmatpush1.bf16.msra.mxu0 0
  %100 = vmatprep.mubr.bf16.mxu0 0
  %101 = vmatmul.mubr.bf16.gmra.mrb[0].mxu0 %v62
  %v102 = vpop.f32.mrb[0].mxu0
  %v103 = vadd.f32 %v41, %v102
  %v104 = vpop.f32.mrb[0].mxu0
  %v105 = vpop.f32.mrb[0].mxu0
  %v106 = vadd.f32 %v41, %v105
  %v107 = vpop.f32.mrb[0].mxu0
  %108 = vdwg.mxu0
  %v109 = vmax.f32 %v103, 0.0
  %v110 = vmax.f32 %v106, 0.0
  %v111 = vpack.c.bf16 %v110, %v109
  %v112 = vld [vmem:[%s3] sm:$0xf]
  %v113 = vld [vmem:[%s3 + $0x4] sm:$0xf]
  %v114 = vld [vmem:[%s3 + $0x8] sm:$0xf]
  %v115 = vld [vmem:[%s3 + $0xc] sm:$0xf]
  %v116 = vld [vmem:[%s4] sm:$0x1]
  %v118 = vlaneseq
  %v119 = vshrl.u32 %v118, 7
  %v120 = vsub.s32 0, %v119
  %v121 = vrot.slane %v116, %v120
  %v127 = vunpack.c.l.b16 %v112
  %v128 = vunpack.c.l.b16 %v113
  %v129 = vunpack.c.l.b16 %v114
  %v130 = vunpack.c.l.b16 %v115
  %v131 = vpack.c.b16 %v128, %v127
  %v132 = vpack.c.b16 %v130, %v129
  %vm135 = vcmask 261120
  %v137 = vsel %vm135, %v111, 0
  %139 = vmatprep.subr.bf16.mxu0 0
  %140 = vmatpush1.bf16.msra.mxu0 %v131
  %141 = vmatprep.subr.bf16.mxu0 0
  %142 = vmatpush1.bf16.msra.mxu0 %v132
  %143 = vmatprep.subr.bf16.mxu0 0
  %144 = vmatpush1.bf16.msra.mxu0 0
  %145 = vmatprep.subr.bf16.mxu0 0
  %146 = vmatpush1.bf16.msra.mxu0 0
  %147 = vmatprep.subr.bf16.mxu0 0
  %148 = vmatpush1.bf16.msra.mxu0 0
  %149 = vmatprep.subr.bf16.mxu0 0
  %150 = vmatpush1.bf16.msra.mxu0 0
  %151 = vmatprep.subr.bf16.mxu0 0
  %152 = vmatpush1.bf16.msra.mxu0 0
  %153 = vmatprep.subr.bf16.mxu0 0
  %154 = vmatpush1.bf16.msra.mxu0 0
  %155 = vmatprep.subr.bf16.mxu0 0
  %156 = vmatpush1.bf16.msra.mxu0 0
  %157 = vmatprep.subr.bf16.mxu0 0
  %158 = vmatpush1.bf16.msra.mxu0 0
  %159 = vmatprep.subr.bf16.mxu0 0
  %160 = vmatpush1.bf16.msra.mxu0 0
  %161 = vmatprep.subr.bf16.mxu0 0
  %162 = vmatpush1.bf16.msra.mxu0 0
  %163 = vmatprep.subr.bf16.mxu0 0
  %164 = vmatpush1.bf16.msra.mxu0 0
  %165 = vmatprep.subr.bf16.mxu0 0
  %166 = vmatpush1.bf16.msra.mxu0 0
  %167 = vmatprep.subr.bf16.mxu0 0
  %168 = vmatpush1.bf16.msra.mxu0 0
  %169 = vmatprep.subr.bf16.mxu0 0
  %170 = vmatpush1.bf16.msra.mxu0 0
  %171 = vmatprep.mubr.bf16.mxu0 0
  %172 = vmatmul.mubr.bf16.gmra.mrb[0].mxu0 %v137
  %v173 = vpop.f32.mrb[0].mxu0
  %v174 = vadd.f32 %v121, %v173
  %v175 = vpop.f32.mrb[0].mxu0
  %v176 = vpop.f32.mrb[0].mxu0
  %v177 = vadd.f32 %v121, %v176
  %v178 = vpop.f32.mrb[0].mxu0
  %179 = vdwg.mxu0
  %v180 = vmax.f32 %v174, 0.0
  %v181 = vmax.f32 %v177, 0.0
  %v182 = vpack.c.bf16 %v181, %v180
  %v183 = vld [vmem:[%s5] sm:$0xf]
  %v184 = vld [vmem:[%s5 + $0x4] sm:$0xf]
  %v185 = vld [vmem:[%s6] sm:$0x1]
  %v187 = vlaneseq
  %v188 = vshrl.u32 %v187, 7
  %v189 = vsub.s32 0, %v188
  %v190 = vrot.slane %v185, %v189
  %v194 = vunpack.c.l.b16 %v183
  %v195 = vunpack.c.l.b16 %v184
  %v196 = vpack.c.b16 %v195, %v194
  %vm198 = vcmask 130048
  %v200 = vsel %vm198, %v182, 0
  %202 = vmatprep.subr.bf16.mxu0 0
  %203 = vmatpush1.bf16.msra.mxu0 %v196
  %204 = vmatprep.subr.bf16.mxu0 0
  %205 = vmatpush1.bf16.msra.mxu0 0
  %206 = vmatprep.subr.bf16.mxu0 0
  %207 = vmatpush1.bf16.msra.mxu0 0
  %208 = vmatprep.subr.bf16.mxu0 0
  %209 = vmatpush1.bf16.msra.mxu0 0
  %210 = vmatprep.subr.bf16.mxu0 0
  %211 = vmatpush1.bf16.msra.mxu0 0
  %212 = vmatprep.subr.bf16.mxu0 0
  %213 = vmatpush1.bf16.msra.mxu0 0
  %214 = vmatprep.subr.bf16.mxu0 0
  %215 = vmatpush1.bf16.msra.mxu0 0
  %216 = vmatprep.subr.bf16.mxu0 0
  %217 = vmatpush1.bf16.msra.mxu0 0
  %218 = vmatprep.subr.bf16.mxu0 0
  %219 = vmatpush1.bf16.msra.mxu0 0
  %220 = vmatprep.subr.bf16.mxu0 0
  %221 = vmatpush1.bf16.msra.mxu0 0
  %222 = vmatprep.subr.bf16.mxu0 0
  %223 = vmatpush1.bf16.msra.mxu0 0
  %224 = vmatprep.subr.bf16.mxu0 0
  %225 = vmatpush1.bf16.msra.mxu0 0
  %226 = vmatprep.subr.bf16.mxu0 0
  %227 = vmatpush1.bf16.msra.mxu0 0
  %228 = vmatprep.subr.bf16.mxu0 0
  %229 = vmatpush1.bf16.msra.mxu0 0
  %230 = vmatprep.subr.bf16.mxu0 0
  %231 = vmatpush1.bf16.msra.mxu0 0
  %232 = vmatprep.subr.bf16.mxu0 0
  %233 = vmatpush1.bf16.msra.mxu0 0
  %234 = vmatprep.mubr.bf16.mxu0 0
  %235 = vmatmul.mubr.bf16.gmra.mrb[0].mxu0 %v200
  %v236 = vpop.f32.mrb[0].mxu0
  %v237 = vadd.f32 %v190, %v236
  %v238 = vpop.f32.mrb[0].mxu0
  %v239 = vpop.f32.mrb[0].mxu0
  %v240 = vadd.f32 %v190, %v239
  %v241 = vpop.f32.mrb[0].mxu0
  %242 = vdwg.mxu0
  %vm243 = vcmask 64512
  %v244 = vsel %vm243, %v237, -inf
  %245 = vmax.xlane.f32.xlu0 %v244
  %v246 = vpop.xlane.xlu0 %245
  %v247 = vsel %vm243, %v240, -inf
  %248 = vmax.xlane.f32.xlu0 %v247
  %v249 = vpop.xlane.xlu0 %248
  %v250 = vsub.f32 %v237, %v246
  %v251 = vsub.f32 %v240, %v249
  %v252 = vmul.f32 %v250, 1.442695
  %v253 = vpow.pop %v252
  %v254 = vmul.f32 %v251, 1.442695
  %v255 = vpow.pop %v254
  %v256 = vsel %vm243, %v253, 0.0
  %257 = vadd.xlane.f32.xlu0 %v256
  %v258 = vpop.xlane.xlu0 %257
  %v259 = vsel %vm243, %v255, 0.0
  %260 = vadd.xlane.f32.xlu0 %v259
  %v261 = vpop.xlane.xlu0 %260
  %v262 = vlog2.pop %v258
  %v263 = vmul.f32 %v262, 0.6931472
  %v264 = vlog2.pop %v261
  %v265 = vmul.f32 %v264, 0.6931472
  %v266 = vsub.f32 %v250, %v263
  %v267 = vsub.f32 %v251, %v265
  %268 = vst.msk [vmem:[%s7] sm:$0xff] %vm243, %v266
  %269 = vst.msk [vmem:[%s7 + $0x8] sm:$0xff] %vm243, %v267
  // Predicated region
  $region30: #{_mlp_forward_jit.1} parent=0 // pred_check
    _
  $region31: #{_mlp_forward_jit.1} parent=0 // pred_check_branch
    %271 = sbr.rel (0) target = $region33
  $region32: #{_mlp_forward_jit.1} parent=0 // pred_region
    _
  $region33: #{_mlp_forward_jit.1} parent=0 // pred_fallthru
    _
  // Predicated region
  $region34: #{_mlp_forward_jit.1} parent=0 // pred_check
    _
  $region35: #{_mlp_forward_jit.1} parent=0 // pred_check_branch
    %273 = sbr.rel (0) target = $region37
  $region36: #{_mlp_forward_jit.1} parent=0 // pred_region
    _
  $region37: #{_mlp_forward_jit.1} parent=0 // pred_fallthru
    _

</llo_original>
